<compile_context>
chip_gen: v7x
topology: tpu7x:2x2x1
jax: 0.10.0
libtpu: 0.0.40
codegen_flags: <defaults>
</compile_context>

<pallas_src>
import functools

import jax
import jax.numpy as jnp
from jax.experimental import pallas as pl
from jax.experimental.pallas import tpu as pltpu


_POINTS_PER_TILE = 512 * 1024          # points per grid step (packed path)
_ROWWISE_LANES_PER_TILE = 192 * 1024   # lane cap for the unpacked fallback path
_VMEM_LIMIT_BYTES = 32 * 1024 * 1024


def _lane_tiling(cols, cols_per_tile, split_min=256):
    """Pick (block lane width, num tiles) for a lane-dense array of width `cols`."""
    tiles = pl.cdiv(cols, cols_per_tile)
    if tiles == 1 and cols >= split_min:
        tiles = 2                       # feed both TensorCores on v7x
    if tiles == 1:
        return cols, 1                  # single full-extent block (exempt from 128 rule)
    tn = pl.cdiv(pl.cdiv(cols, tiles), 128) * 128
    return tn, pl.cdiv(cols, tn)


def _packed_kernel(scale_ref, x_ref, o_ref, *, eps_sq, d):
    # x_ref block: (8*d, TN) f32-compatible.  Rows [8k, 8k+8) hold coordinate k;
    # element (8k+s, c) of every coordinate group belongs to the same point.
    xs = [x_ref[8 * k:8 * (k + 1), :].astype(jnp.float32) for k in range(d)]
    sq = xs[0] * xs[0]
    for k in range(1, d):
        sq = sq + xs[k] * xs[k]                       # full-vreg VALU adds, no XLU
    inv = jax.lax.rsqrt(jnp.maximum(sq, jnp.float32(eps_sq)))
    inv = inv * scale_ref[0]                          # fold the learned scale
    for k in range(d):
        o_ref[8 * k:8 * (k + 1), :] = (xs[k] * inv).astype(o_ref.dtype)


def _rowwise_kernel(scale_ref, x_ref, o_ref, *, eps_sq, d):
    # Fallback when M % 8 != 0: x_ref block is (d, TN), coordinate dim on sublanes.
    xs = [x_ref[k:k + 1, :].astype(jnp.float32) for k in range(d)]
    sq = xs[0] * xs[0]
    for k in range(1, d):
        sq = sq + xs[k] * xs[k]
    inv = jax.lax.rsqrt(jnp.maximum(sq, jnp.float32(eps_sq)))
    inv = inv * scale_ref[0]
    for k in range(d):
        o_ref[k:k + 1, :] = (xs[k] * inv).astype(o_ref.dtype)


def _run(kernel, x2d, scale, tn_eff, tiles):
    rows, cols = x2d.shape
    return pl.pallas_call(
        kernel,
        out_shape=jax.ShapeDtypeStruct((rows, cols), x2d.dtype),
        grid=(tiles,),
        in_specs=[
            pl.BlockSpec(memory_space=pltpu.MemorySpace.SMEM),   # scale (scalar param)
            pl.BlockSpec((rows, tn_eff), lambda i: (0, i)),      # lane-dense coords tile
        ],
        out_specs=pl.BlockSpec((rows, tn_eff), lambda i: (0, i)),
        compiler_params=pltpu.CompilerParams(
            dimension_semantics=("parallel",),
            vmem_limit_bytes=_VMEM_LIMIT_BYTES,
        ),
    )(scale, x2d)


def coords_norm_lane_dense(x_dm, scale, *, eps=1e-8, points_per_tile=_POINTS_PER_TILE):
    """CoordsNorm on lane-dense input.

    x_dm:  (D, M) array, coordinate dim first, points on the last (lane) axis.
    scale: (1,) learned scalar parameter.
    """
    d, m = x_dm.shape
    scale = scale.astype(jnp.float32)
    # Guard eps^2 against f32 underflow (only matters for eps < ~1.1e-19).
    eps_sq = max(float(eps) ** 2, float(jnp.finfo(jnp.float32).tiny))

    if m % 8 == 0 and m > 0:
        # Metadata-only repack: (D, M) contiguous -> (8*D, M//8); every vreg dense.
        cols = m // 8
        x2d = x_dm.reshape(8 * d, cols)
        tn_eff, tiles = _lane_tiling(cols, max(128, points_per_tile // 8))
        kernel = functools.partial(_packed_kernel, eps_sq=eps_sq, d=d)
        out2d = _run(kernel, x2d, scale, tn_eff, tiles)
        return out2d.reshape(d, m)
    else:
        cols = m
        tn_eff, tiles = _lane_tiling(
            cols, max(128, min(points_per_tile, _ROWWISE_LANES_PER_TILE)))
        kernel = functools.partial(_rowwise_kernel, eps_sq=eps_sq, d=d)
        return _run(kernel, x_dm, scale, tn_eff, tiles)


def coords_norm(coords, scale, *, eps=1e-8, points_per_tile=_POINTS_PER_TILE):
    """PyTorch-layout entry point: coords (..., D) with the coordinate dim last.

    NOTE: this costs one XLA transpose pass each way to present a lane-dense
    (D, M) slab.  TODO(synk): have callers keep the (D, M) layout end-to-end
    (use coords_norm_lane_dense) or fuse CoordsNorm into the producer kernel.
    """
    *batch, d = coords.shape
    x_dm = coords.reshape(-1, d).T                       # (D, M)
    out_dm = coords_norm_lane_dense(x_dm, scale, eps=eps,
                                    points_per_tile=points_per_tile)
    return out_dm.T.reshape(*batch, d)


def coords_norm_ref(coords, scale, *, eps=1e-8):
    norm = jnp.linalg.norm(coords, axis=-1, keepdims=True)
    return coords / jnp.maximum(norm, eps) * scale[0]


if __name__ == "__main__":
    key = jax.random.PRNGKey(0)

    # Small shapes implied by the module: batch of point clouds, 3-D coordinates.
    B, N, D = 2, 128, 3
    coords = jax.random.normal(key, (B, N, D), dtype=jnp.float32)

    # Deterministic parameter init, matching __init__: scale = zeros(1).fill_(scale_init)
    scale = jnp.full((1,), 1.0, dtype=jnp.float32)

    out = jax.block_until_ready(coords_norm(coords, scale, eps=1e-8))
    ref = coords_norm_ref(coords, scale, eps=1e-8)
    assert out.shape == coords.shape and out.dtype == coords.dtype
    assert jnp.allclose(out, ref, atol=1e-5, rtol=1e-4), \
        float(jnp.max(jnp.abs(out - ref)))

    # Packed path with multiple tiles + ragged last lane block (m = 2000, m % 8 == 0).
    coords2 = jax.random.normal(jax.random.PRNGKey(1), (2, 1000, 3), dtype=jnp.float32)
    out2 = jax.block_until_ready(coords_norm(coords2, scale, points_per_tile=512))
    ref2 = coords_norm_ref(coords2, scale)
    assert jnp.allclose(out2, ref2, atol=1e-5, rtol=1e-4)

    # Rowwise fallback (m = 1001, not a multiple of 8), ragged tiling, plus a
    # zero-norm point to exercise the eps clamp (must stay finite / zero).
    coords3 = jax.random.normal(jax.random.PRNGKey(2), (1, 1001, 3), dtype=jnp.float32)
    coords3 = coords3.at[0, 0].set(0.0)
    out3 = jax.block_until_ready(coords_norm(coords3, scale))
    ref3 = coords_norm_ref(coords3, scale)
    assert jnp.all(jnp.isfinite(out3))
    assert jnp.allclose(out3, ref3, atol=1e-5, rtol=1e-4)

    print("KERNEL_OK")
</pallas_src>

<mosaic_0001>
module attributes {stable_mosaic.version = 11 : i64} {
  func.func @_packed_kernel(%arg0: i32, %arg1: memref<1xf32, #tpu.memory_space<smem>>, %arg2: memref<24x32xf32, #tpu.memory_space<vmem>>, %arg3: memref<24x32xf32, #tpu.memory_space<vmem>>) attributes {dimension_semantics = [#tpu.dimension_semantics<parallel>], iteration_bounds = array<i64: 1>, scalar_prefetch = 0 : i64, scratch_operands = 0 : i64, tpu.core_type = #tpu.core_type<tc>, window_params = [{transform_indices = @transform_0, window_bounds = array<i64: 1>}, {transform_indices = @transform_1, window_bounds = array<i64: 24, 32>}, {transform_indices = @transform_2, window_bounds = array<i64: 24, 32>}]} {
    %c0 = arith.constant 0 : index
    %c0_0 = arith.constant 0 : index
    %0 = vector.load %arg2[%c0, %c0_0] : memref<24x32xf32, #tpu.memory_space<vmem>>, vector<8x32xf32>
    %c8 = arith.constant 8 : index
    %c0_1 = arith.constant 0 : index
    %1 = vector.load %arg2[%c8, %c0_1] : memref<24x32xf32, #tpu.memory_space<vmem>>, vector<8x32xf32>
    %c16 = arith.constant 16 : index
    %c0_2 = arith.constant 0 : index
    %2 = vector.load %arg2[%c16, %c0_2] : memref<24x32xf32, #tpu.memory_space<vmem>>, vector<8x32xf32>
    %3 = arith.mulf %0, %0 : vector<8x32xf32>
    %4 = arith.mulf %1, %1 : vector<8x32xf32>
    %5 = arith.addf %3, %4 : vector<8x32xf32>
    %6 = arith.mulf %2, %2 : vector<8x32xf32>
    %7 = arith.addf %5, %6 : vector<8x32xf32>
    %cst = arith.constant 1.000000e-16 : f32
    %8 = vector.broadcast %cst : f32 to vector<8x32xf32>
    %9 = arith.maximumf %7, %8 : vector<8x32xf32>
    %10 = math.rsqrt %9 : vector<8x32xf32>
    %c0_3 = arith.constant 0 : index
    %11 = memref.load %arg1[%c0_3] : memref<1xf32, #tpu.memory_space<smem>>
    %12 = vector.broadcast %11 : f32 to vector<8x32xf32>
    %13 = arith.mulf %10, %12 : vector<8x32xf32>
    %14 = arith.mulf %0, %13 : vector<8x32xf32>
    %c0_4 = arith.constant 0 : index
    %c0_5 = arith.constant 0 : index
    %15 = vector.load %arg3[%c0_4, %c0_5] : memref<24x32xf32, #tpu.memory_space<vmem>>, vector<8x32xf32>
    tpu.vector_store %arg3[%c0_4, %c0_5], %14 {strides = array<i32>} : memref<24x32xf32, #tpu.memory_space<vmem>>, vector<8x32xf32>,
    %16 = arith.mulf %1, %13 : vector<8x32xf32>
    %c8_6 = arith.constant 8 : index
    %c0_7 = arith.constant 0 : index
    %17 = vector.load %arg3[%c8_6, %c0_7] : memref<24x32xf32, #tpu.memory_space<vmem>>, vector<8x32xf32>
    tpu.vector_store %arg3[%c8_6, %c0_7], %16 {strides = array<i32>} : memref<24x32xf32, #tpu.memory_space<vmem>>, vector<8x32xf32>,
    %18 = arith.mulf %2, %13 : vector<8x32xf32>
    %c16_8 = arith.constant 16 : index
    %c0_9 = arith.constant 0 : index
    %19 = vector.load %arg3[%c16_8, %c0_9] : memref<24x32xf32, #tpu.memory_space<vmem>>, vector<8x32xf32>
    tpu.vector_store %arg3[%c16_8, %c0_9], %18 {strides = array<i32>} : memref<24x32xf32, #tpu.memory_space<vmem>>, vector<8x32xf32>,
    return
  }
  func.func @transform_0(%arg0: i32) -> i32 {
    %c0_i32 = arith.constant 0 : i32
    %c0_i32_0 = arith.constant 0 : i32
    return %c0_i32 : i32
  }
  func.func @transform_1(%arg0: i32) -> (i32, i32) {
    %c0_i32 = arith.constant 0 : i32
    %c0_i32_0 = arith.constant 0 : i32
    return %c0_i32, %arg0 : i32, i32
  }
  func.func @transform_2(%arg0: i32) -> (i32, i32) {
    %c0_i32 = arith.constant 0 : i32
    %c0_i32_0 = arith.constant 0 : i32
    return %c0_i32, %arg0 : i32, i32
  }
}

</mosaic_0001>

<llo_original>
// kernel: tpu_custom_call.1
$region0: #{tpu_custom_call.1}
  #allocation0 [shape = 'u32[]', space=smem, size = 0x4, offset = 0x4, fixed_abs, tag = 'smem constant byte address 0x4 - core index']
  #allocation1 [shape = 'u32[144,128]{1,0:T(1,128)}', space=vmem, size = 0x12000, scoped, tag = 'internal scratch']
  #allocation2 [shape = 'f32[1]{0:T(128)S(6)}', space=smem, size = 0x200, scoped, tag = 'scoped memory for tpu_custom_call.1']
  %s0 = inlined_call_operand.<no memory space> [shape: f32[1], index: 0, kind: input, shape index: {}]
  %s1 = inlined_call_operand.hbm [shape: f32[24,32], index: 1, kind: input, shape index: {}]
  %s2 = inlined_call_operand.hbm [shape: f32[24,32], index: 2, kind: output, shape index: {}]
  %s3 = sld [smem:[#allocation0]]
  $region22: #{tpu_custom_call.1} parent=0
    _
  %s5 = ssub.s32 1, %s3
  %s6 = scalar_select 0, %s5, %s3
  %7 = sst [smem:[#allocation2]] %s0
  $region1: #{tpu_custom_call.1} parent=0
    #allocation3 [shape = 'u8[12288]{0}', space=vmem, size = 0x3000, scoped, tag = 'input window, operand 1, single buffered']
    #allocation4 [shape = 's32[1]{0}', space=sflag, size = 0x4, scoped, tag = 'scoped memory for tpu_custom_call.1']
    #allocation5 [shape = 's32[1]{0}', space=sflag, size = 0x4, scoped, tag = 'scoped memory for tpu_custom_call.1']
    #allocation6 [shape = 'u8[12288]{0}', space=vmem, size = 0x3000, scoped, tag = 'output window, operand 0, single buffered']
    %8 = vsyncpa [#allocation4], 0
    %9 = vsyncpa [#allocation5], 0
    // Predicated region
    $region2: #{tpu_custom_call.1} parent=1 // pred_check
      _
    $region3: #{tpu_custom_call.1} parent=1 // pred_check_branch
      %11 = sbr.rel (0) target = $region5
    $region4: #{tpu_custom_call.1} parent=1 // pred_region
      _
    $region5: #{tpu_custom_call.1} parent=1 // pred_fallthru
      _
    // Predicated region
    $region6: #{tpu_custom_call.1} parent=1 // pred_check
      _
    $region7: #{tpu_custom_call.1} parent=1 // pred_check_branch
      %13 = sbr.rel (0) target = $region9
    $region8: #{tpu_custom_call.1} parent=1 // pred_region
      %s15 = ssub.s32 384, 384
      %16 = vsyncadd [#allocation4], %s15
      %s17 = sshll.u32 [#allocation3], 4
      %s18 = int_to_ptr.vmem [resolvable:$true] %s17
      %23 = dma.hbm_to_vmem [thread:$0]  %s1, 384, %s18, [#allocation4], 128, 128, 8
    $region9: #{tpu_custom_call.1} parent=1 // pred_fallthru
      _
    // Predicated region
    $region10: #{tpu_custom_call.1} parent=1 // pred_check
      _
    $region11: #{tpu_custom_call.1} parent=1 // pred_check_branch
      %25 = sbr.rel (0) target = $region13
    $region12: #{tpu_custom_call.1} parent=1 // pred_region
      %26 = dma.done [#allocation4], 384
    $region13: #{tpu_custom_call.1} parent=1 // pred_fallthru
      _
    %v27 = vld [vmem:[#allocation3] sm:$0xff]
    %v28 = vld [vmem:[#allocation3 + $0x8] sm:$0xff]
    %v29 = vld [vmem:[#allocation3 + $0x10] sm:$0xff]
    %v30 = vmul.f32 %v27, %v27
    %v31 = vmul.f32 %v28, %v28
    %v32 = vadd.f32 %v30, %v31
    %v33 = vmul.f32 %v29, %v29
    %v34 = vadd.f32 %v32, %v33
    %v35 = vmax.f32 %v34, 1e-16
    %v36 = vrsqrt.pop %v35
    %s37 = sld [smem:[#allocation2]]
    %v38 = vstv %s37
    %v39 = vmul.f32 %v36, %v38
    %v40 = vmul.f32 %v27, %v39
    %vm41 = vcmask 261120
    %42 = vst.msk [vmem:[#allocation6] sm:$0xff] %vm41, %v40
    %v43 = vmul.f32 %v28, %v39
    %44 = vst.msk [vmem:[#allocation6 + $0x8] sm:$0xff] %vm41, %v43
    %v45 = vmul.f32 %v29, %v39
    %46 = vst.msk [vmem:[#allocation6 + $0x10] sm:$0xff] %vm41, %v45
    // Predicated region
    $region14: #{tpu_custom_call.1} parent=1 // pred_check
      _
    $region15: #{tpu_custom_call.1} parent=1 // pred_check_branch
      %48 = sbr.rel (0) target = $region17
    $region16: #{tpu_custom_call.1} parent=1 // pred_region
      %s50 = ssub.s32 384, 384
      %51 = vsyncadd [#allocation5], %s50
      %s52 = sshll.u32 [#allocation6], 4
      %s53 = int_to_ptr.vmem [resolvable:$true] %s52
      %58 = dma.vmem_to_hbm [thread:$0]  %s53, 384, %s2, [#allocation5], 128, 128, 8
    $region17: #{tpu_custom_call.1} parent=1 // pred_fallthru
      _
    // Predicated region
    $region18: #{tpu_custom_call.1} parent=1 // pred_check
      _
    $region19: #{tpu_custom_call.1} parent=1 // pred_check_branch
      %60 = sbr.rel (0) target = $region21
    $region20: #{tpu_custom_call.1} parent=1 // pred_region
      %61 = dma.done [#allocation5], 384
    $region21: #{tpu_custom_call.1} parent=1 // pred_fallthru
      _
    %62 = vsyncpa [#allocation4], 1
    %63 = vsyncpa [#allocation5], 1

</llo_original>
